<compile_context>
chip_gen: v7x
topology: tpu7x:2x2x1
jax: 0.10.0
libtpu: 0.0.40
codegen_flags: <defaults>
</compile_context>

<pallas_src>
import functools

import numpy as np
import jax
import jax.numpy as jnp
from jax import lax
from jax.experimental import pallas as pl
from jax.experimental.pallas import tpu as pltpu

_LANE = 128


def _build_position_encoding_table(d_model, max_seq_len):
    """Exactly reproduces the numpy table built in PositionalEncoding.__init__."""
    j = np.arange(d_model)
    pos = np.arange(max_seq_len)
    pe = pos[:, None] / np.power(10000.0, 2.0 * (j // 2) / d_model)
    pe[:, 0::2] = np.sin(pe[:, 0::2])
    pe[:, 1::2] = np.cos(pe[:, 1::2])
    pe = pe.astype(np.float32)
    pad_row = np.zeros((1, d_model), np.float32)
    return np.concatenate([pad_row, pe], axis=0)  # (max_seq_len + 1, d_model)


def _per_block_budget_bytes():
    """Output-block byte budget per generation (kept under scoped-VMEM defaults)."""
    try:
        kind = jax.devices()[0].device_kind.lower()
    except Exception:
        kind = ""
    if "v5" in kind:          # v5e: 16 MiB scoped default -> small blocks
        return 2 << 20
    return 4 << 20            # v6e / v7x / default: well past the 85%-roofline knee


def _pos_enc_kernel(len_ref, table_ref, emb_ref, *, d_model, col_tile):
    # len_ref:   VMEM (bblk, 1)      int32  per-row sequence lengths
    # table_ref: VMEM (1, col_tile)  f32    flattened table rows 1.. (lane-dense slab)
    # emb_ref:   VMEM (bblk, col_tile) f32  output block
    j = pl.program_id(1)
    # global flattened column index of each output element; t < len  <=>  col < len*D
    col = lax.broadcasted_iota(jnp.int32, emb_ref.shape, 1) + j * col_tile
    limit = len_ref[...] * d_model                      # (bblk, 1)
    emb_ref[...] = jnp.where(col < limit, table_ref[...], jnp.float32(0.0))


class PositionalEncodingTPU:
    """JAX/Pallas counterpart of the PyTorch PositionalEncoding module."""

    def __init__(self, d_model, max_seq_len):
        self.d_model = int(d_model)
        self.max_seq_len = int(max_seq_len)
        table = _build_position_encoding_table(self.d_model, self.max_seq_len)
        self.table_host = table                                   # (max_seq_len+1, D)
        # Drop pad row (handled by the mask); row p-1 holds position p. Flatten
        # lane-dense and upload ONCE; rows for any max_len <= max_seq_len are a prefix.
        flat = np.ascontiguousarray(table[1:]).reshape(1, self.max_seq_len * self.d_model)
        self._table_flat = jax.device_put(jnp.asarray(flat))
        self._call_cache = {}

    # ---- tiling / pallas_call construction -------------------------------------
    def _build_call(self, B, max_len):
        D = self.d_model
        TD = max_len * D
        budget = _per_block_budget_bytes()

        # Column tile: multiple of 128 lanes, small enough that an 8-row output block
        # (plus the 128-lane-padded lens column, ~512 B/row) fits the budget.
        td_pad = -(-TD // _LANE) * _LANE
        max_cols = max(_LANE, ((budget // 8 - 512) // 4) // _LANE * _LANE)
        ctile = min(td_pad, max_cols)

        # Batch block: rows that fit the budget with this column tile (>= 8 by
        # construction of ctile); must be a multiple of 8 or equal to the full B.
        rows_fit = budget // (ctile * 4 + 512)
        if rows_fit >= B:
            bblk = B
        else:
            bblk = max(8, (rows_fit // 8) * 8)

        # v7x: keep >= 2 batch blocks on non-trivial outputs so the "parallel" axes
        # can shard the HBM store across both TensorCores (harmless on 1-TC chips).
        if bblk == B and B >= 16 and B * TD * 4 > (2 << 20):
            bblk = ((-(-B // 2)) + 7) // 8 * 8

        grid = (pl.cdiv(B, bblk), pl.cdiv(TD, ctile))
        kernel = functools.partial(_pos_enc_kernel, d_model=D, col_tile=ctile)
        return pl.pallas_call(
            kernel,
            out_shape=jax.ShapeDtypeStruct((B, TD), jnp.float32),
            grid=grid,
            in_specs=[
                pl.BlockSpec((bblk, 1), lambda i, j: (i, 0)),      # lengths
                pl.BlockSpec((1, ctile), lambda i, j: (0, j)),     # flattened table slab
            ],
            out_specs=pl.BlockSpec((bblk, ctile), lambda i, j: (i, j)),
            compiler_params=pltpu.CompilerParams(
                dimension_semantics=("parallel", "parallel")),
        )

    # ---- forward ----------------------------------------------------------------
    def forward(self, input_len):
        """
        input_len: host int array of sequence lengths, shape (B,)
        returns (embeddings (B, max_len, d_model) f32, input_pos (B, max_len) int32)

        max_len = max(input_len) is a data-dependent output shape in the PyTorch
        module, so it is resolved on host here (JAX needs static shapes).
        """
        input_len = np.asarray(input_len, dtype=np.int32).reshape(-1)
        B = int(input_len.shape[0])
        max_len = int(input_len.max())
        if max_len < 1:
            raise ValueError("all sequence lengths are zero (degenerate output shape)")
        if max_len > self.max_seq_len:
            raise ValueError("input_len exceeds the max_seq_len of the lookup table")

        key = (B, max_len)
        call = self._call_cache.get(key)
        if call is None:
            call = self._build_call(B, max_len)
            self._call_cache[key] = call

        lens = jnp.asarray(input_len.reshape(B, 1))
        emb_flat = call(lens, self._table_flat)                    # (B, max_len*D)
        emb = emb_flat.reshape(B, max_len, self.d_model)           # free (contiguous)

        # Integer positions depend only on the host-resident lengths -> compute here.
        t = np.arange(1, max_len + 1, dtype=np.int32)[None, :]
        pos = np.where(t <= input_len[:, None], t, 0).astype(np.int32)
        return emb, jnp.asarray(pos)

    __call__ = forward


if __name__ == "__main__":
    d_model = 32
    max_seq_len = 16
    batch = 2

    # deterministic example input: per-example sequence lengths in [1, max_seq_len]
    key = jax.random.PRNGKey(0)
    input_len = jax.random.randint(key, (batch,), 1, max_seq_len + 1)
    input_len_host = np.asarray(input_len)

    module = PositionalEncodingTPU(d_model, max_seq_len)
    emb, pos = module(input_len_host)
    jax.block_until_ready((emb, pos))

    # pure-numpy reference (mirrors the PyTorch forward)
    table = module.table_host
    max_len = int(input_len_host.max())
    pos_ref = np.zeros((batch, max_len), np.int32)
    for ind, length in enumerate(input_len_host):
        for p in range(1, int(length) + 1):
            pos_ref[ind, p - 1] = p
    emb_ref = table[pos_ref]  # embedding lookup (row 0 is the zero pad row)

    assert np.array_equal(np.asarray(pos), pos_ref), "position indices mismatch"
    np.testing.assert_array_equal(np.asarray(emb), emb_ref)

    print("KERNEL_OK")
</pallas_src>

<mosaic_0001>
module attributes {stable_mosaic.version = 11 : i64} {
  func.func @_pos_enc_kernel(%arg0: i32, %arg1: i32, %arg2: memref<2x1xi32, #tpu.memory_space<vmem>>, %arg3: memref<1x256xf32, #tpu.memory_space<vmem>>, %arg4: memref<2x256xf32, #tpu.memory_space<vmem>>) attributes {dimension_semantics = [#tpu.dimension_semantics<parallel>, #tpu.dimension_semantics<parallel>], iteration_bounds = array<i64: 1, 1>, scalar_prefetch = 0 : i64, scratch_operands = 0 : i64, tpu.core_type = #tpu.core_type<tc>, window_params = [{transform_indices = @transform_0, window_bounds = array<i64: 2, 1>}, {transform_indices = @transform_1, window_bounds = array<i64: 1, 256>}, {transform_indices = @transform_2, window_bounds = array<i64: 2, 256>}]} {
    %0 = tpu.iota {dimensions = array<i32: 1>} : vector<2x256xi32>
    %c256_i32 = arith.constant 256 : i32
    %1 = arith.muli %arg1, %c256_i32 : i32
    %2 = vector.broadcast %1 : i32 to vector<2x256xi32>
    %3 = arith.addi %0, %2 : vector<2x256xi32>
    %c0 = arith.constant 0 : index
    %c0_0 = arith.constant 0 : index
    %4 = vector.load %arg2[%c0, %c0_0] : memref<2x1xi32, #tpu.memory_space<vmem>>, vector<2x1xi32>
    %c32_i32 = arith.constant 32 : i32
    %5 = vector.broadcast %c32_i32 : i32 to vector<2x1xi32>
    %6 = arith.muli %4, %5 : vector<2x1xi32>
    %7 = vector.broadcast %6 : vector<2x1xi32> to vector<2x256xi32>
    %8 = arith.cmpi slt, %3, %7 : vector<2x256xi32>
    %c0_1 = arith.constant 0 : index
    %c0_2 = arith.constant 0 : index
    %9 = vector.load %arg3[%c0_1, %c0_2] : memref<1x256xf32, #tpu.memory_space<vmem>>, vector<1x256xf32>
    %cst = arith.constant 0.000000e+00 : f32
    %10 = vector.shape_cast %9 : vector<1x256xf32> to vector<1x256xf32>
    %11 = vector.broadcast %10 : vector<1x256xf32> to vector<2x256xf32>
    %12 = vector.broadcast %cst : f32 to vector<2x256xf32>
    %13 = arith.select %8, %11, %12 : vector<2x256xi1>, vector<2x256xf32>
    %c0_3 = arith.constant 0 : index
    %c0_4 = arith.constant 0 : index
    %14 = vector.load %arg4[%c0_3, %c0_4] : memref<2x256xf32, #tpu.memory_space<vmem>>, vector<2x256xf32>
    tpu.vector_store %arg4[%c0_3, %c0_4], %13 {strides = array<i32>} : memref<2x256xf32, #tpu.memory_space<vmem>>, vector<2x256xf32>,
    return
  }
  func.func @transform_0(%arg0: i32, %arg1: i32) -> (i32, i32) {
    %c0_i32 = arith.constant 0 : i32
    %c0_i32_0 = arith.constant 0 : i32
    return %arg0, %c0_i32 : i32, i32
  }
  func.func @transform_1(%arg0: i32, %arg1: i32) -> (i32, i32) {
    %c0_i32 = arith.constant 0 : i32
    %c0_i32_0 = arith.constant 0 : i32
    return %c0_i32, %arg1 : i32, i32
  }
  func.func @transform_2(%arg0: i32, %arg1: i32) -> (i32, i32) {
    %c0_i32 = arith.constant 0 : i32
    return %arg0, %arg1 : i32, i32
  }
}

</mosaic_0001>

<llo_original>
// kernel: tpu_custom_call.1
$region0: #{tpu_custom_call.1}
  #allocation0 [shape = 'u32[]', space=smem, size = 0x4, offset = 0x4, fixed_abs, tag = 'smem constant byte address 0x4 - core index']
  #allocation1 [shape = 'u32[144,128]{1,0:T(1,128)}', space=vmem, size = 0x12000, scoped, tag = 'internal scratch']
  %s0 = inlined_call_operand.vmem [shape: s32[2,1], index: 0, kind: input, shape index: {}]
  %s1 = inlined_call_operand.vmem [shape: f32[1,512], index: 1, kind: input, shape index: {}]
  %s2 = inlined_call_operand.hbm [shape: f32[2,192], index: 2, kind: output, shape index: {}]
  %s3 = sld [smem:[#allocation0]]
  $region18: #{tpu_custom_call.1} parent=0
    _
  %s5 = ssub.s32 1, %s3
  %s6 = scalar_select 0, %s5, %s3
  $region1: #{tpu_custom_call.1} parent=0
    #allocation2 [shape = 'u8[2048]{0}', space=vmem, size = 0x800, scoped, tag = 'output window, operand 0, single buffered']
    #allocation3 [shape = 's32[1]{0}', space=sflag, size = 0x4, scoped, tag = 'scoped memory for tpu_custom_call.1']
    %7 = vsyncpa [#allocation3], 0
    // Predicated region
    $region2: #{tpu_custom_call.1} parent=1 // pred_check
      _
    $region3: #{tpu_custom_call.1} parent=1 // pred_check_branch
      %9 = sbr.rel (0) target = $region5
    $region4: #{tpu_custom_call.1} parent=1 // pred_region
      _
    $region5: #{tpu_custom_call.1} parent=1 // pred_fallthru
      _
    // Predicated region
    $region6: #{tpu_custom_call.1} parent=1 // pred_check
      _
    $region7: #{tpu_custom_call.1} parent=1 // pred_check_branch
      %11 = sbr.rel (0) target = $region9
    $region8: #{tpu_custom_call.1} parent=1 // pred_region
      _
    $region9: #{tpu_custom_call.1} parent=1 // pred_fallthru
      _
    %v12 = vlaneseq
    %v13 = vand.u32 %v12, 127
    %v14 = vadd.s32 %v13, 128
    %s15 = smul.u32 0, 256
    %v16 = vstv %s15
    %v17 = vadd.s32 %v13, %v16
    %v18 = vadd.s32 %v14, %v16
    %v19 = vld [vmem:[%s0] sm:$0x3]
    %v20 = vmul.u32 %v19, 32
    %21 = vset.pattern.permute.xlu0 0
    %22 = vperm.xlu0 %21, %v20
    %v23 = vpop.permute.xlu0 %22
    %vm24 = vcmp.lt.s32.totalorder %v17, %v23
    %vm25 = vcmp.lt.s32.totalorder %v18, %v23
    %v26 = vld [vmem:[%s1] sm:$0x3]
    %v28 = vlaneseq
    %v29 = vshrl.u32 %v28, 7
    %v30 = vsub.s32 0, %v29
    %v31 = vrot.slane %v26, %v30
    %v32 = vlaneseq
    %v33 = vshrl.u32 %v32, 7
    %v34 = vsub.s32 1, %v33
    %v35 = vrot.slane %v26, %v34
    %v38 = vsel %vm24, %v31, 0.0
    %v39 = vsel %vm25, %v35, 0.0
    %v42 = vcombine.low %v38, %v39
    %v44 = vunpack.c.l.s4 1983009808
    %v45 = vunpack.c.0.s8 %v44
    %v46 = vlaneseq
    %v47 = vshrl.u32 %v46, 7
    %v48 = vsub.s32 %v45, %v47
    %v49 = vrot.slane %v42, %v48
    %51 = vst [vmem:[#allocation2] sm:$0xf] %v49
    // Predicated region
    $region10: #{tpu_custom_call.1} parent=1 // pred_check
      _
    $region11: #{tpu_custom_call.1} parent=1 // pred_check_branch
      %53 = sbr.rel (0) target = $region13
    $region12: #{tpu_custom_call.1} parent=1 // pred_region
      %s55 = ssub.s32 64, 64
      %56 = vsyncadd [#allocation3], %s55
      %s58 = sshll.u32 [#allocation2], 4
      %s59 = int_to_ptr.vmem [resolvable:$true] %s58
      %61 = dma.vmem_to_hbm [thread:$0]  %s59, 64, %s2, [#allocation3]
    $region13: #{tpu_custom_call.1} parent=1 // pred_fallthru
      _
    // Predicated region
    $region14: #{tpu_custom_call.1} parent=1 // pred_check
      _
    $region15: #{tpu_custom_call.1} parent=1 // pred_check_branch
      %63 = sbr.rel (0) target = $region17
    $region16: #{tpu_custom_call.1} parent=1 // pred_region
      %64 = dma.done [#allocation3], 64
    $region17: #{tpu_custom_call.1} parent=1 // pred_fallthru
      _
    %65 = vsyncpa [#allocation3], 1

</llo_original>
